<compile_context>
chip_gen: v5e
topology: v5e:2x2
jax: 0.10.0
libtpu: 0.0.40
codegen_flags: <defaults>
</compile_context>

<pallas_src>
import math

import jax
import jax.numpy as jnp
from jax.experimental import pallas as pl
from jax.experimental.pallas import tpu as pltpu


def _round_up(v: int, m: int) -> int:
    return ((v + m - 1) // m) * m


def _cdiv(a: int, b: int) -> int:
    return (a + b - 1) // b


def _vmem_capacity_bytes() -> int:
    """Trace-time VMEM capacity query; conservative (v7x) fallback."""
    try:
        return int(pltpu.get_tpu_info().vmem_capacity_bytes)
    except Exception:  # pragma: no cover - defensive fallback
        return 64 * 1024 * 1024


def _divisor_tile(dim: int, align: int, cap: int):
    """Largest multiple of `align` that divides `dim` and is <= cap, or None."""
    if dim % align != 0:
        return None
    t = cap - (cap % align)
    while t >= align:
        if dim % t == 0:
            return t
        t -= align
    return None


def _pick_tile(dim: int, align: int, cap: int) -> int:
    """Tile size <= cap, multiple of `align`, preferring zero padding."""
    if dim <= cap:
        return _round_up(dim, align)
    d = _divisor_tile(dim, align, cap)
    return d if d is not None else cap


def _mlp_kernel(x_ref, w_ref, b_ref, o_ref, acc_ref):
    # x_ref: (tm, tk)   activation tile
    # w_ref: (tn, tk)   weight tile, PyTorch [out, in] layout (NOT transposed)
    # b_ref: (1, tn)    bias tile
    # o_ref: (tm, tn)   output tile
    # acc_ref: (tm, tn) float32 accumulator (persists across the K grid axis)
    k = pl.program_id(2)

    @pl.when(k == 0)
    def _():
        acc_ref[...] = jnp.zeros_like(acc_ref)

    # Contract x (tm, tk) with w (tn, tk) over their last dims -> (tm, tn).
    # Explicit HIGHEST precision: exact f32 MXU passes (review flagged the
    # implicit default as a correctness risk for large K).
    acc_ref[...] += jax.lax.dot_general(
        x_ref[...], w_ref[...],
        dimension_numbers=(((1,), (1,)), ((), ())),
        preferred_element_type=jnp.float32,
        precision=jax.lax.Precision.HIGHEST)

    @pl.when(k == pl.num_programs(2) - 1)
    def _():
        acc = acc_ref[...] + b_ref[...]  # broadcast (1, tn) over rows
        # Exact GELU (matches torch.nn.GELU default, approximate='none'):
        #   0.5 * x * (1 + erf(x / sqrt(2)))
        gelu = 0.5 * acc * (1.0 + jax.lax.erf(acc * (1.0 / math.sqrt(2.0))))
        o_ref[...] = gelu.astype(o_ref.dtype)


def mlp_layer(x, weight, bias, *, tm=None, tn=None, tk=None):
    """GELU(x @ weight.T + bias) via a tiled Pallas TPU kernel.

    Args:
      x:      [..., input_size] float32
      weight: [output_size, input_size] float32 (PyTorch nn.Linear convention)
      bias:   [output_size] float32
      tm, tn, tk: optional tile-size overrides (auto-chosen if None).
    Returns:
      [..., output_size], same dtype as x.
    """
    *lead, k = x.shape
    n, k_w = weight.shape
    assert k == k_w, "input feature dim mismatch"

    m = 1
    for d in lead:
        m *= d
    x2d = x.reshape(m, k)

    # ---- generation-aware tile caps & VMEM budget ----
    vmem_cap = _vmem_capacity_bytes()
    if vmem_cap >= 96 * 1024 * 1024:          # v5e / v6e: 128 MiB VMEM
        tm_cap, tn_cap, tk_cap = 1024, 1024, 2048
        vmem_limit = 100 * 1024 * 1024
    else:                                     # v7x: 64 MiB VMEM per TensorCore
        tm_cap, tn_cap, tk_cap = 512, 512, 2048
        vmem_limit = 48 * 1024 * 1024

    tm_auto = tm is None
    tm = _pick_tile(m, 8, tm_cap) if tm is None else _round_up(tm, 8)
    tn = _pick_tile(n, 128, tn_cap) if tn is None else _round_up(tn, 128)
    tk = _pick_tile(k, 128, tk_cap) if tk is None else _round_up(tk, 128)

    # Give both v7x TensorCores work: if the two parallel axes collapse to a
    # single block, split the M axis (never N: keeps output lane-dense).
    if tm_auto and m > 8:
        gi = _cdiv(_round_up(m, tm), tm)
        gj = _cdiv(_round_up(n, tn), tn)
        if gi * gj < 2:
            tm = _round_up(_cdiv(m, 2), 8)

    # Footprint safety: double-buffered x/W/out tiles + f32 acc + bias.
    def _footprint(a, b, c):
        return 4 * (2 * (a * c + b * c + a * b) + a * b + 2 * b)

    while _footprint(tm, tn, tk) > int(0.75 * vmem_limit) and tk > 128:
        tk = max(128, _round_up(tk // 2, 128))

    # ---- pad to tile multiples only when needed (prefer no-pad tiles) ----
    mp = _round_up(m, tm)
    kp = _round_up(k, tk)
    npad = _round_up(n, tn)

    # NOTE: for a real model, pre-pad the (static) weight/bias once outside
    # the hot path; here it only triggers when shapes aren't tile multiples.
    x_p = x2d if (mp, kp) == (m, k) else jnp.pad(
        x2d, ((0, mp - m), (0, kp - k)))
    w_p = weight if (npad, kp) == (n, k) else jnp.pad(
        weight, ((0, npad - n), (0, kp - k)))
    b_p = (bias if npad == n else jnp.pad(bias, (0, npad - n))).reshape(1, npad)

    grid = (mp // tm, npad // tn, kp // tk)

    # bytes_accessed reflects actual streaming: x re-read per N block,
    # W re-read per M block, output + bias written/read once.
    cost = pl.CostEstimate(
        flops=2 * mp * npad * kp,
        transcendentals=mp * npad,
        bytes_accessed=4 * (mp * kp * grid[1] + npad * kp * grid[0]
                            + mp * npad + npad))

    out2d = pl.pallas_call(
        _mlp_kernel,
        out_shape=jax.ShapeDtypeStruct((mp, npad), x.dtype),
        grid_spec=pltpu.PrefetchScalarGridSpec(
            num_scalar_prefetch=0,
            grid=grid,
            in_specs=[
                pl.BlockSpec((tm, tk), lambda i, j, kk: (i, kk)),   # x
                pl.BlockSpec((tn, tk), lambda i, j, kk: (j, kk)),   # W (as-is)
                pl.BlockSpec((1, tn), lambda i, j, kk: (0, j)),     # bias
            ],
            out_specs=pl.BlockSpec((tm, tn), lambda i, j, kk: (i, j)),
            scratch_shapes=[pltpu.VMEM((tm, tn), jnp.float32)],
        ),
        compiler_params=pltpu.CompilerParams(
            dimension_semantics=("parallel", "parallel", "arbitrary"),
            vmem_limit_bytes=vmem_limit),
        cost_estimate=cost,
    )(x_p, w_p, b_p)

    if (mp, npad) != (m, n):
        out2d = out2d[:m, :n]
    return out2d.reshape(*lead, n)


def _reference(x, weight, bias):
    y = jnp.dot(x, weight.T, precision=jax.lax.Precision.HIGHEST) + bias
    return 0.5 * y * (1.0 + jax.lax.erf(y / math.sqrt(2.0)))


if __name__ == "__main__":
    key = jax.random.PRNGKey(0)

    # --- Test 1: small shapes consistent with the module (token MLP) ---
    batch, seq, input_size, output_size = 2, 8, 32, 32
    kx, kw, kb, key = jax.random.split(key, 4)
    x = jax.random.normal(kx, (batch, seq, input_size), dtype=jnp.float32)
    bound = 1.0 / math.sqrt(input_size)
    weight = jax.random.uniform(
        kw, (output_size, input_size), minval=-bound, maxval=bound,
        dtype=jnp.float32)
    bias = jax.random.uniform(
        kb, (output_size,), minval=-bound, maxval=bound, dtype=jnp.float32)

    out = jax.block_until_ready(mlp_layer(x, weight, bias))
    ref = _reference(x, weight, bias)
    assert out.shape == (batch, seq, output_size)
    assert jnp.allclose(out, ref, atol=2e-5, rtol=2e-5)

    # --- Test 2: exercise multi-step K accumulation + padding/slicing
    #     (small forced tiles -> grid = (2, 2, 2)) ---
    m2, k2, n2 = 16, 250, 200
    kx, kw, kb, key = jax.random.split(key, 4)
    x2 = jax.random.normal(kx, (m2, k2), dtype=jnp.float32)
    bound2 = 1.0 / math.sqrt(k2)
    w2 = jax.random.uniform(kw, (n2, k2), minval=-bound2, maxval=bound2,
                            dtype=jnp.float32)
    b2 = jax.random.uniform(kb, (n2,), minval=-bound2, maxval=bound2,
                            dtype=jnp.float32)
    out2 = jax.block_until_ready(mlp_layer(x2, w2, b2, tm=8, tn=128, tk=128))
    ref2 = _reference(x2, w2, b2)
    assert out2.shape == (m2, n2)
    assert jnp.allclose(out2, ref2, atol=2e-5, rtol=2e-5)

    # --- Test 3: auto tile selection with no-pad divisor tiles ---
    m3, k3, n3 = 64, 256, 256
    kx, kw, kb, key = jax.random.split(key, 4)
    x3 = jax.random.normal(kx, (m3, k3), dtype=jnp.float32)
    bound3 = 1.0 / math.sqrt(k3)
    w3 = jax.random.uniform(kw, (n3, k3), minval=-bound3, maxval=bound3,
                            dtype=jnp.float32)
    b3 = jax.random.uniform(kb, (n3,), minval=-bound3, maxval=bound3,
                            dtype=jnp.float32)
    out3 = jax.block_until_ready(mlp_layer(x3, w3, b3))
    ref3 = _reference(x3, w3, b3)
    assert out3.shape == (m3, n3)
    assert jnp.allclose(out3, ref3, atol=2e-5, rtol=2e-5)

    print("KERNEL_OK")
</pallas_src>

<mosaic_0001>
module attributes {stable_mosaic.version = 11 : i64} {
  func.func @_mlp_kernel(%arg0: i32, %arg1: i32, %arg2: i32, %arg3: memref<8x128xf32, #tpu.memory_space<vmem>>, %arg4: memref<128x128xf32, #tpu.memory_space<vmem>>, %arg5: memref<1x128xf32, #tpu.memory_space<vmem>>, %arg6: memref<8x128xf32, #tpu.memory_space<vmem>>, %arg7: memref<8x128xf32, #tpu.memory_space<vmem>>) attributes {dimension_semantics = [#tpu.dimension_semantics<parallel>, #tpu.dimension_semantics<parallel>, #tpu.dimension_semantics<arbitrary>], iteration_bounds = array<i64: 2, 1, 1>, scalar_prefetch = 0 : i64, scratch_operands = 1 : i64, tpu.core_type = #tpu.core_type<tc>, window_params = [{transform_indices = @transform_0, window_bounds = array<i64: 8, 128>}, {transform_indices = @transform_1, window_bounds = array<i64: 128, 128>}, {transform_indices = @transform_2, window_bounds = array<i64: 1, 128>}, {transform_indices = @transform_3, window_bounds = array<i64: 8, 128>}]} {
    %c0_i32 = arith.constant 0 : i32
    %0 = arith.cmpi eq, %arg2, %c0_i32 : i32
    %1 = arith.extui %0 : i1 to i32
    %c0_i32_0 = arith.constant 0 : i32
    %2 = arith.cmpi ne, %1, %c0_i32_0 : i32
    scf.if %2 {
      %cst_10 = arith.constant 0.000000e+00 : f32
      %12 = vector.broadcast %cst_10 : f32 to vector<8x128xf32>
      %c0_11 = arith.constant 0 : index
      %c0_12 = arith.constant 0 : index
      %13 = vector.load %arg7[%c0_11, %c0_12] : memref<8x128xf32, #tpu.memory_space<vmem>>, vector<8x128xf32>
      tpu.vector_store %arg7[%c0_11, %c0_12], %12 {strides = array<i32>} : memref<8x128xf32, #tpu.memory_space<vmem>>, vector<8x128xf32>,
    } else {
    }
    %c0 = arith.constant 0 : index
    %c0_1 = arith.constant 0 : index
    %3 = vector.load %arg7[%c0, %c0_1] : memref<8x128xf32, #tpu.memory_space<vmem>>, vector<8x128xf32>
    %c0_2 = arith.constant 0 : index
    %c0_3 = arith.constant 0 : index
    %4 = vector.load %arg3[%c0_2, %c0_3] : memref<8x128xf32, #tpu.memory_space<vmem>>, vector<8x128xf32>
    %c0_4 = arith.constant 0 : index
    %c0_5 = arith.constant 0 : index
    %5 = vector.load %arg4[%c0_4, %c0_5] : memref<128x128xf32, #tpu.memory_space<vmem>>, vector<128x128xf32>
    %cst = arith.constant dense<0.000000e+00> : vector<8x128xf32>
    %6 = tpu.matmul %4, %5, %cst {dimension_numbers = #tpu.dot_dimension_numbers<[1], [1], [0], [0], [0, 0, 1, 0], [], []>, precision = #tpu.contract_precision<fp32>} : vector<8x128xf32>, vector<128x128xf32>, vector<8x128xf32> -> vector<8x128xf32>
    %7 = arith.addf %3, %6 : vector<8x128xf32>
    %c0_6 = arith.constant 0 : index
    %c0_7 = arith.constant 0 : index
    %8 = vector.load %arg7[%c0_6, %c0_7] : memref<8x128xf32, #tpu.memory_space<vmem>>, vector<8x128xf32>
    tpu.vector_store %arg7[%c0_6, %c0_7], %7 {strides = array<i32>} : memref<8x128xf32, #tpu.memory_space<vmem>>, vector<8x128xf32>,
    %c0_i32_8 = arith.constant 0 : i32
    %9 = arith.cmpi eq, %arg2, %c0_i32_8 : i32
    %10 = arith.extui %9 : i1 to i32
    %c0_i32_9 = arith.constant 0 : i32
    %11 = arith.cmpi ne, %10, %c0_i32_9 : i32
    scf.if %11 {
      %c0_10 = arith.constant 0 : index
      %c0_11 = arith.constant 0 : index
      %12 = vector.load %arg7[%c0_10, %c0_11] : memref<8x128xf32, #tpu.memory_space<vmem>>, vector<8x128xf32>
      %c0_12 = arith.constant 0 : index
      %c0_13 = arith.constant 0 : index
      %13 = vector.load %arg5[%c0_12, %c0_13] : memref<1x128xf32, #tpu.memory_space<vmem>>, vector<1x128xf32>
      %14 = vector.broadcast %13 : vector<1x128xf32> to vector<8x128xf32>
      %15 = arith.addf %12, %14 : vector<8x128xf32>
      %cst_14 = arith.constant 5.000000e-01 : f32
      %16 = vector.broadcast %cst_14 : f32 to vector<8x128xf32>
      %17 = arith.mulf %16, %15 : vector<8x128xf32>
      %cst_15 = arith.constant 0.707106769 : f32
      %18 = vector.broadcast %cst_15 : f32 to vector<8x128xf32>
      %19 = arith.mulf %15, %18 : vector<8x128xf32>
      %20 = math.erf %19 : vector<8x128xf32>
      %cst_16 = arith.constant 1.000000e+00 : f32
      %21 = vector.broadcast %cst_16 : f32 to vector<8x128xf32>
      %22 = arith.addf %21, %20 : vector<8x128xf32>
      %23 = arith.mulf %17, %22 : vector<8x128xf32>
      %c0_17 = arith.constant 0 : index
      %c0_18 = arith.constant 0 : index
      %24 = vector.load %arg6[%c0_17, %c0_18] : memref<8x128xf32, #tpu.memory_space<vmem>>, vector<8x128xf32>
      tpu.vector_store %arg6[%c0_17, %c0_18], %23 {strides = array<i32>} : memref<8x128xf32, #tpu.memory_space<vmem>>, vector<8x128xf32>,
    } else {
    }
    return
  }
  func.func @transform_0(%arg0: i32, %arg1: i32, %arg2: i32) -> (i32, i32) {
    %c0_i32 = arith.constant 0 : i32
    return %arg0, %arg2 : i32, i32
  }
  func.func @transform_1(%arg0: i32, %arg1: i32, %arg2: i32) -> (i32, i32) {
    %c0_i32 = arith.constant 0 : i32
    return %arg1, %arg2 : i32, i32
  }
  func.func @transform_2(%arg0: i32, %arg1: i32, %arg2: i32) -> (i32, i32) {
    %c0_i32 = arith.constant 0 : i32
    %c0_i32_0 = arith.constant 0 : i32
    return %c0_i32, %arg1 : i32, i32
  }
  func.func @transform_3(%arg0: i32, %arg1: i32, %arg2: i32) -> (i32, i32) {
    %c0_i32 = arith.constant 0 : i32
    return %arg0, %arg1 : i32, i32
  }
}

</mosaic_0001>

<llo_original>
// kernel: tpu_custom_call.1
$region0: #{tpu_custom_call.1}
  #allocation0 [shape = 'u32[]', space=smem, size = 0x4, offset = 0x4, fixed_abs, tag = 'smem constant byte address 0x4 - core index']
  #allocation1 [shape = 'u32[72,128]{1,0:T(1,128)}', space=vmem, size = 0x9000, scoped, tag = 'internal scratch']
  #allocation2 [shape = 'f32[8,128]{1,0:T(8,128)}', space=vmem, size = 0x1000, scoped, tag = 'scratch operand']
  %s0 = inlined_call_operand.hbm [shape: f32[16,128], index: 0, kind: input, shape index: {}]
  %s1 = inlined_call_operand.hbm [shape: f32[128,128], index: 1, kind: input, shape index: {}]
  %s2 = inlined_call_operand.vmem [shape: f32[1,128], index: 2, kind: input, shape index: {}]
  %s3 = inlined_call_operand.hbm [shape: f32[16,128], index: 3, kind: output, shape index: {}]
  %s4 = sld [smem:[#allocation0]]
  $region61: #{tpu_custom_call.1} parent=0
    _
  %s6 = ssub.s32 1, %s4
  %s7 = scalar_select 0, %s6, %s4
  $region1: #{tpu_custom_call.1} parent=0
    #allocation3 [shape = 'u8[8192]{0}', space=vmem, size = 0x2000, scoped, tag = 'input window, operand 0']
    #allocation4 [shape = 's32[2]{0}', space=sflag, size = 0x8, scoped, tag = 'scoped memory for tpu_custom_call.1']
    #allocation5 [shape = 's32[2]{0}', space=sflag, size = 0x8, scoped, tag = 'scoped memory for tpu_custom_call.1']
    #allocation6 [shape = 'u8[65536]{0}', space=vmem, size = 0x10000, scoped, tag = 'input window, operand 1, single buffered']
    #allocation7 [shape = 's32[1]{0}', space=sflag, size = 0x4, scoped, tag = 'scoped memory for tpu_custom_call.1']
    #allocation8 [shape = 'u8[8192]{0}', space=vmem, size = 0x2000, scoped, tag = 'output window, operand 0']
    %8 = vsyncpa [#allocation4], 0
    %s9 = scalar_lea.sflag [#allocation4], 1
    %10 = vsyncpa %s9, 0
    %11 = vsyncpa [#allocation7], 0
    %12 = vsyncpa [#allocation5], 0
    %s13 = scalar_lea.sflag [#allocation5], 1
    %14 = vsyncpa %s13, 0
    loop: start=0, step=1, limit=4
    $region2: #{tpu_custom_call.1} parent=1 // loop_pre_header
      _
    $region3: #{tpu_custom_call.1} parent=1 // loop_header
      %s16 = sphi 0, %s20
      %p17 = scmp.ge.s32.totalorder %s16, 4
      %s23 = sphi 0, %s42
      %s24 = sphi 0, %s38
      %s25 = sphi 0, %s34
      %s26 = sphi 0, %s23
      %s27 = sphi 0, %s24
      %s28 = sphi 0, %s25
      %s29 = sphi 0, %s26
      %s30 = sphi 0, %s27
      %s31 = sphi 0, %s28
      %s47 = sphi 0, %s49
      %s50 = sphi 0, %s47
      %s51 = sphi 0, %s50
      %s67 = sphi 0, %s51
      %s75 = sphi 0, %s77
      %s78 = sphi 0, %s75
      %s79 = sphi 0, %s78
      %s95 = sphi 0, %s79
      %s101 = sphi 0, %s103
      %s104 = sphi 0, %s101
      %s105 = sphi 0, %s104
      %s121 = sphi 0, %s105
      %s129 = sphi 0, %s131
      %s132 = sphi 0, %s129
      %s133 = sphi 0, %s132
      %s149 = sphi 0, %s133
    $region4: #{tpu_custom_call.1} parent=1 // loop_header_branch
      %19 = sbr.rel (%p17) target = $region8
    $region5: #{tpu_custom_call.1} parent=1 // loop_body
      %s21 = ssub.s32 %s16, 1
      %s22 = ssub.s32 %s16, 2
      %s32 = sadd.s32 1, %s25
      %p33 = scmp.ge.s32.totalorder %s32, 1
      %s34 = scalar_select %p33, 0, %s32
      %s35 = sadd.s32 1, %s24
      %s36 = scalar_select %p33, %s35, %s24
      %p37 = scmp.ge.s32.totalorder %s36, 1
      %s38 = scalar_select %p37, 0, %s36
      %s39 = sadd.s32 1, %s23
      %s40 = scalar_select %p37, %s39, %s23
      %p41 = scmp.ge.s32.totalorder %s40, 2
      %s42 = scalar_select %p41, 0, %s40
      %s43 = ssub.s32 %s23, %s42
      %s44 = ssub.s32 %s25, %s34
      %s45 = sor.u32 %s43, %s44
      %p46 = scmp.eq.s32.totalorder %s45, 0
      %s48 = sadd.s32 %s47, 1
      %s49 = scalar_select %p46, %s47, %s48
      %p52 = pneg %p46
      %p53 = scmp.eq.s32.totalorder %s16, 1
      %p54 = por %p52, %p53
      %p55 = scmp.ne.s32.totalorder %s47, %s50
      %p56 = scmp.eq.s32.totalorder %s16, 0
      %p57 = por %p55, %p56
      %p58 = scmp.ne.s32.totalorder %s47, %s50
      %p59 = scmp.eq.s32.totalorder %s21, 1
      %p60 = por %p58, %p59
      %p61 = scmp.ne.s32.totalorder %s50, %s51
      %p62 = scmp.eq.s32.totalorder %s21, 0
      %p63 = por %p61, %p62
      %p64 = scmp.ne.s32.totalorder %s50, %s51
      %p65 = scmp.eq.s32.totalorder %s22, 1
      %p66 = por %p64, %p65
      %p68 = scmp.ne.s32.totalorder %s51, %s67
      %p69 = scmp.eq.s32.totalorder %s22, 0
      %p70 = por %p68, %p69
      %s71 = ssub.s32 %s24, %s38
      %s72 = ssub.s32 %s25, %s34
      %s73 = sor.u32 %s71, %s72
      %p74 = scmp.eq.s32.totalorder %s73, 0
      %s76 = sadd.s32 %s75, 1
      %s77 = scalar_select %p74, %s75, %s76
      %p80 = pneg %p74
      %p81 = scmp.eq.s32.totalorder %s16, 1
      %p82 = por %p80, %p81
      %p83 = scmp.ne.s32.totalorder %s75, %s78
      %p84 = scmp.eq.s32.totalorder %s16, 0
      %p85 = por %p83, %p84
      %p86 = scmp.ne.s32.totalorder %s75, %s78
      %p87 = scmp.eq.s32.totalorder %s21, 1
      %p88 = por %p86, %p87
      %p89 = scmp.ne.s32.totalorder %s78, %s79
      %p90 = scmp.eq.s32.totalorder %s21, 0
      %p91 = por %p89, %p90
      %p92 = scmp.ne.s32.totalorder %s78, %s79
      %p93 = scmp.eq.s32.totalorder %s22, 1
      %p94 = por %p92, %p93
      %p96 = scmp.ne.s32.totalorder %s79, %s95
      %p97 = scmp.eq.s32.totalorder %s22, 0
      %p98 = por %p96, %p97
      %s99 = ssub.s32 %s24, %s38
      %p100 = scmp.eq.s32.totalorder %s99, 0
      %s102 = sadd.s32 %s101, 1
      %s103 = scalar_select %p100, %s101, %s102
      %p106 = pneg %p100
      %p107 = scmp.eq.s32.totalorder %s16, 1
      %p108 = por %p106, %p107
      %p109 = scmp.ne.s32.totalorder %s101, %s104
      %p110 = scmp.eq.s32.totalorder %s16, 0
      %p111 = por %p109, %p110
      %p112 = scmp.ne.s32.totalorder %s101, %s104
      %p113 = scmp.eq.s32.totalorder %s21, 1
      %p114 = por %p112, %p113
      %p115 = scmp.ne.s32.totalorder %s104, %s105
      %p116 = scmp.eq.s32.totalorder %s21, 0
      %p117 = por %p115, %p116
      %p118 = scmp.ne.s32.totalorder %s104, %s105
      %p119 = scmp.eq.s32.totalorder %s22, 1
      %p120 = por %p118, %p119
      %p122 = scmp.ne.s32.totalorder %s105, %s121
      %p123 = scmp.eq.s32.totalorder %s22, 0
      %p124 = por %p122, %p123
      %s125 = ssub.s32 %s23, %s42
      %s126 = ssub.s32 %s24, %s38
      %s127 = sor.u32 %s125, %s126
      %p128 = scmp.eq.s32.totalorder %s127, 0
      %s130 = sadd.s32 %s129, 1
      %s131 = scalar_select %p128, %s129, %s130
      %p134 = pneg %p128
      %p135 = scmp.eq.s32.totalorder %s16, 1
      %p136 = por %p134, %p135
      %p137 = scmp.ne.s32.totalorder %s129, %s132
      %p138 = scmp.eq.s32.totalorder %s16, 0
      %p139 = por %p137, %p138
      %p140 = scmp.ne.s32.totalorder %s129, %s132
      %p141 = scmp.eq.s32.totalorder %s21, 1
      %p142 = por %p140, %p141
      %p143 = scmp.ne.s32.totalorder %s132, %s133
      %p144 = scmp.eq.s32.totalorder %s21, 0
      %p145 = por %p143, %p144
      %p146 = scmp.ne.s32.totalorder %s132, %s133
      %p147 = scmp.eq.s32.totalorder %s22, 1
      %p148 = por %p146, %p147
      %p150 = scmp.ne.s32.totalorder %s133, %s149
      %p151 = scmp.eq.s32.totalorder %s22, 0
      %p152 = por %p150, %p151
      %p153 = scmp.le.s32.totalorder 1, %s16
      %p154 = scmp.lt.s32.totalorder %s16, 3
      %p155 = pnand %p153, %p154
      %p156 = pneg %p155
      // Predicated region
      $region9: #{tpu_custom_call.1} parent=5 // pred_check
        _
      $region10: #{tpu_custom_call.1} parent=5 // pred_check_branch
        %158 = sbr.rel (%p155) target = $region12
      $region11: #{tpu_custom_call.1} parent=5 // pred_region
        %s159 = ssub.s32 %s16, 1
        // Predicated region
        $region13: #{tpu_custom_call.1} parent=11 // pred_check
          %p160 = pneg %p91
        $region14: #{tpu_custom_call.1} parent=11 // pred_check_branch
          %162 = sbr.rel (%p160) target = $region16
        $region15: #{tpu_custom_call.1} parent=11 // pred_region
          %s163 = smul.u32 16, %s27
          %165 = vsyncadd [#allocation7], 0
          %s166 = sadd.s32 %s28, %s163
          %s167 = smul.addr %s166, 8
          %s168 = scalar_lea.hbm %s1, %s167
          %s169 = sshll.u32 %s168, 4
          %s170 = int_to_ptr.hbm [resolvable:$true] %s169
          %s171 = sshll.u32 [#allocation6], 4
          %s172 = int_to_ptr.vmem [resolvable:$true] %s171
          %177 = dma.hbm_to_vmem [thread:$0]  %s170, 2048, %s172, [#allocation7], 128, 128, 8
        $region16: #{tpu_custom_call.1} parent=11 // pred_fallthru
          _
        // Predicated region
        $region17: #{tpu_custom_call.1} parent=11 // pred_check
          %p178 = pneg %p117
        $region18: #{tpu_custom_call.1} parent=11 // pred_check_branch
          %180 = sbr.rel (%p178) target = $region20
        $region19: #{tpu_custom_call.1} parent=11 // pred_region
          %p181 = scmp.lt.s32.totalorder %s27, 0
          %s182 = scalar_select %p181, %s27, 0
          %s183 = scalar_lea.vmem %s2, %s182
        $region20: #{tpu_custom_call.1} parent=11 // pred_fallthru
          _
      $region12: #{tpu_custom_call.1} parent=5 // pred_fallthru
        _
      %p184 = scmp.lt.s32.totalorder %s16, 2
      // Predicated region
      $region21: #{tpu_custom_call.1} parent=5 // pred_check
        %p185 = pneg %p184
      $region22: #{tpu_custom_call.1} parent=5 // pred_check_branch
        %187 = sbr.rel (%p185) target = $region24
      $region23: #{tpu_custom_call.1} parent=5 // pred_region
        // Predicated region
        $region25: #{tpu_custom_call.1} parent=23 // pred_check
          %p188 = pneg %p57
        $region26: #{tpu_custom_call.1} parent=23 // pred_check_branch
          %190 = sbr.rel (%p188) target = $region28
        $region27: #{tpu_custom_call.1} parent=23 // pred_region
          %s191 = sand.u32 %s47, 1
          %s192 = scalar_lea.sflag [#allocation4], %s191
          %s193 = sand.u32 %s47, 1
          %s194 = smul.addr %s193, 8
          %s195 = scalar_lea.vmem [#allocation3], %s194
          %197 = vsyncadd %s192, 0
          %s198 = sadd.s32 %s25, %s23
          %s199 = smul.addr %s198, 8
          %s200 = scalar_lea.hbm %s0, %s199
          %s202 = sshll.u32 %s200, 4
          %s203 = int_to_ptr.hbm [resolvable:$true] %s202
          %s204 = sshll.u32 %s195, 4
          %s205 = int_to_ptr.vmem [resolvable:$true] %s204
          %207 = dma.hbm_to_vmem [thread:$0]  %s203, 128, %s205, %s192
        $region28: #{tpu_custom_call.1} parent=23 // pred_fallthru
          _
      $region24: #{tpu_custom_call.1} parent=5 // pred_fallthru
        _
      %p208 = scmp.le.s32.totalorder 1, %s16
      %p209 = scmp.lt.s32.totalorder %s16, 3
      %p210 = pnand %p208, %p209
      %p211 = pneg %p210
      // Predicated region
      $region29: #{tpu_custom_call.1} parent=5 // pred_check
        _
      $region30: #{tpu_custom_call.1} parent=5 // pred_check_branch
        %213 = sbr.rel (%p210) target = $region32
      $region31: #{tpu_custom_call.1} parent=5 // pred_region
        %s214 = ssub.s32 %s16, 1
        %s215 = sand.u32 %s50, 1
        %s216 = scalar_lea.sflag [#allocation4], %s215
        %s217 = sand.u32 %s50, 1
        %s218 = smul.addr %s217, 8
        %s219 = scalar_lea.vmem [#allocation3], %s218
        // Predicated region
        $region33: #{tpu_custom_call.1} parent=31 // pred_check
          %p220 = pneg %p63
        $region34: #{tpu_custom_call.1} parent=31 // pred_check_branch
          %222 = sbr.rel (%p220) target = $region36
        $region35: #{tpu_custom_call.1} parent=31 // pred_region
          %224 = dma.done %s216, 128
        $region36: #{tpu_custom_call.1} parent=31 // pred_fallthru
          _
        // Predicated region
        $region37: #{tpu_custom_call.1} parent=31 // pred_check
          %p225 = pneg %p91
        $region38: #{tpu_custom_call.1} parent=31 // pred_check_branch
          %227 = sbr.rel (%p225) target = $region40
        $region39: #{tpu_custom_call.1} parent=31 // pred_region
          %229 = dma.done [#allocation7], 2048
        $region40: #{tpu_custom_call.1} parent=31 // pred_fallthru
          _
        %s230 = sand.u32 %s50, 1
        %s231 = scalar_lea.sflag [#allocation4], %s230
        %s232 = sand.u32 %s50, 1
        %s233 = smul.addr %s232, 8
        %s234 = scalar_lea.vmem [#allocation3], %s233
        %p235 = pneg %p63
        %p236 = pneg %p60
        %p237 = pneg %p91
        %p238 = pneg %p88
        %p239 = scmp.lt.s32.totalorder %s27, 0
        %s240 = scalar_select %p239, %s27, 0
        %s241 = scalar_lea.vmem %s2, %s240
        %p242 = pneg %p117
        %p243 = pneg %p114
        %p244 = pneg %p145
        %p245 = pneg %p142
        %s246 = sand.u32 %s132, 1
        %s247 = scalar_lea.sflag [#allocation5], %s246
        %s248 = sand.u32 %s132, 1
        %s249 = smul.addr %s248, 8
        %s250 = scalar_lea.vmem [#allocation8], %s249
        %s251 = smul.u32 16, %s27
        %p252 = scmp.lt.s32.totalorder %s27, 0
        %s253 = scalar_select %p252, %s27, 0
        %s254 = scalar_lea.vmem %s2, %s253
        %p255 = scmp.eq.s32.totalorder %s28, 0
        // Predicated region
        $region41: #{tpu_custom_call.1} parent=31 // pred_check
          %p256 = pneg %p255
        $region42: #{tpu_custom_call.1} parent=31 // pred_check_branch
          %258 = sbr.rel (%p256) target = $region44
        $region43: #{tpu_custom_call.1} parent=31 // pred_region
          %259 = vst [vmem:[#allocation2] sm:$0xff] 0.0
        $region44: #{tpu_custom_call.1} parent=31 // pred_fallthru
          _
        %v260 = vld [vmem:[#allocation2] sm:$0xff]
        %v261 = vld [vmem:[%s219] sm:$0xff]
        %v262 = vld [vmem:[#allocation6] sm:$0xff]
        %v263 = vld [vmem:[#allocation6 + $0x8] sm:$0xff]
        %v264 = vld [vmem:[#allocation6 + $0x10] sm:$0xff]
        %v265 = vld [vmem:[#allocation6 + $0x18] sm:$0xff]
        %v266 = vld [vmem:[#allocation6 + $0x20] sm:$0xff]
        %v267 = vld [vmem:[#allocation6 + $0x28] sm:$0xff]
        %v268 = vld [vmem:[#allocation6 + $0x30] sm:$0xff]
        %v269 = vld [vmem:[#allocation6 + $0x38] sm:$0xff]
        %v270 = vld [vmem:[#allocation6 + $0x40] sm:$0xff]
        %v271 = vld [vmem:[#allocation6 + $0x48] sm:$0xff]
        %v272 = vld [vmem:[#allocation6 + $0x50] sm:$0xff]
        %v273 = vld [vmem:[#allocation6 + $0x58] sm:$0xff]
        %v274 = vld [vmem:[#allocation6 + $0x60] sm:$0xff]
        %v275 = vld [vmem:[#allocation6 + $0x68] sm:$0xff]
        %v276 = vld [vmem:[#allocation6 + $0x70] sm:$0xff]
        %v277 = vld [vmem:[#allocation6 + $0x78] sm:$0xff]
        %v278 = vand.u32 %v277, 4294901760
        %279 = vmatpush.xpose.msra.mxu0 %v278
        %v280 = vand.u32 %v276, 4294901760
        %281 = vmatpush.xpose.msra.mxu0 %v280
        %v282 = vand.u32 %v275, 4294901760
        %283 = vmatpush.xpose.msra.mxu0 %v282
        %v284 = vand.u32 %v274, 4294901760
        %285 = vmatpush.xpose.msra.mxu0 %v284
        %v286 = vand.u32 %v273, 4294901760
        %287 = vmatpush.xpose.msra.mxu0 %v286
        %v288 = vand.u32 %v272, 4294901760
        %289 = vmatpush.xpose.msra.mxu0 %v288
        %v290 = vand.u32 %v271, 4294901760
        %291 = vmatpush.xpose.msra.mxu0 %v290
        %v292 = vand.u32 %v270, 4294901760
        %293 = vmatpush.xpose.msra.mxu0 %v292
        %v294 = vand.u32 %v269, 4294901760
        %295 = vmatpush.xpose.msra.mxu0 %v294
        %v296 = vand.u32 %v268, 4294901760
        %297 = vmatpush.xpose.msra.mxu0 %v296
        %v298 = vand.u32 %v267, 4294901760
        %299 = vmatpush.xpose.msra.mxu0 %v298
        %v300 = vand.u32 %v266, 4294901760
        %301 = vmatpush.xpose.msra.mxu0 %v300
        %v302 = vand.u32 %v265, 4294901760
        %303 = vmatpush.xpose.msra.mxu0 %v302
        %v304 = vand.u32 %v264, 4294901760
        %305 = vmatpush.xpose.msra.mxu0 %v304
        %v306 = vand.u32 %v263, 4294901760
        %307 = vmatpush.xpose.msra.mxu0 %v306
        %v308 = vand.u32 %v262, 4294901760
        %309 = vmatpush.xpose.msra.mxu0 %v308
        %v310 = vand.u32 %v261, 4294901760
        %v311 = vsub.f32 %v261, %v310
        %v312 = vand.u32 %v311, 4294901760
        %v313 = vsub.f32 %v311, %v312
        %v314 = vand.u32 %v313, 4294901760
        %315 = vmatmul.f32.gmra.mxu0 %v314
        %v316 = vpop.f32.mrf.mxu0
        %v317 = vadd.f32 0.0, %v316
        %318 = vdwg.mxu0
        %v319 = vand.u32 %v277, 4294901760
        %v320 = vsub.f32 %v277, %v319
        %v321 = vand.u32 %v320, 4294901760
        %v322 = vsub.f32 %v320, %v321
        %v323 = vand.u32 %v322, 4294901760
        %324 = vmatpush.xpose.msra.mxu0 %v323
        %v325 = vand.u32 %v276, 4294901760
        %v326 = vsub.f32 %v276, %v325
        %v327 = vand.u32 %v326, 4294901760
        %v328 = vsub.f32 %v326, %v327
        %v329 = vand.u32 %v328, 4294901760
        %330 = vmatpush.xpose.msra.mxu0 %v329
        %v331 = vand.u32 %v275, 4294901760
        %v332 = vsub.f32 %v275, %v331
        %v333 = vand.u32 %v332, 4294901760
        %v334 = vsub.f32 %v332, %v333
        %v335 = vand.u32 %v334, 4294901760
        %336 = vmatpush.xpose.msra.mxu0 %v335
        %v337 = vand.u32 %v274, 4294901760
        %v338 = vsub.f32 %v274, %v337
        %v339 = vand.u32 %v338, 4294901760
        %v340 = vsub.f32 %v338, %v339
        %v341 = vand.u32 %v340, 4294901760
        %342 = vmatpush.xpose.msra.mxu0 %v341
        %v343 = vand.u32 %v273, 4294901760
        %v344 = vsub.f32 %v273, %v343
        %v345 = vand.u32 %v344, 4294901760
        %v346 = vsub.f32 %v344, %v345
        %v347 = vand.u32 %v346, 4294901760
        %348 = vmatpush.xpose.msra.mxu0 %v347
        %v349 = vand.u32 %v272, 4294901760
        %v350 = vsub.f32 %v272, %v349
        %v351 = vand.u32 %v350, 4294901760
        %v352 = vsub.f32 %v350, %v351
        %v353 = vand.u32 %v352, 4294901760
        %354 = vmatpush.xpose.msra.mxu0 %v353
        %v355 = vand.u32 %v271, 4294901760
        %v356 = vsub.f32 %v271, %v355
        %v357 = vand.u32 %v356, 4294901760
        %v358 = vsub.f32 %v356, %v357
        %v359 = vand.u32 %v358, 4294901760
        %360 = vmatpush.xpose.msra.mxu0 %v359
        %v361 = vand.u32 %v270, 4294901760
        %v362 = vsub.f32 %v270, %v361
        %v363 = vand.u32 %v362, 4294901760
        %v364 = vsub.f32 %v362, %v363
        %v365 = vand.u32 %v364, 4294901760
        %366 = vmatpush.xpose.msra.mxu0 %v365
        %v367 = vand.u32 %v269, 4294901760
        %v368 = vsub.f32 %v269, %v367
        %v369 = vand.u32 %v368, 4294901760
        %v370 = vsub.f32 %v368, %v369
        %v371 = vand.u32 %v370, 4294901760
        %372 = vmatpush.xpose.msra.mxu0 %v371
        %v373 = vand.u32 %v268, 4294901760
        %v374 = vsub.f32 %v268, %v373
        %v375 = vand.u32 %v374, 4294901760
        %v376 = vsub.f32 %v374, %v375
        %v377 = vand.u32 %v376, 4294901760
        %378 = vmatpush.xpose.msra.mxu0 %v377
        %v379 = vand.u32 %v267, 4294901760
        %v380 = vsub.f32 %v267, %v379
        %v381 = vand.u32 %v380, 4294901760
        %v382 = vsub.f32 %v380, %v381
        %v383 = vand.u32 %v382, 4294901760
        %384 = vmatpush.xpose.msra.mxu0 %v383
        %v385 = vand.u32 %v266, 4294901760
        %v386 = vsub.f32 %v266, %v385
        %v387 = vand.u32 %v386, 4294901760
        %v388 = vsub.f32 %v386, %v387
        %v389 = vand.u32 %v388, 4294901760
        %390 = vmatpush.xpose.msra.mxu0 %v389
        %v391 = vand.u32 %v265, 4294901760
        %v392 = vsub.f32 %v265, %v391
        %v393 = vand.u32 %v392, 4294901760
        %v394 = vsub.f32 %v392, %v393
        %v395 = vand.u32 %v394, 4294901760
        %396 = vmatpush.xpose.msra.mxu0 %v395
        %v397 = vand.u32 %v264, 4294901760
        %v398 = vsub.f32 %v264, %v397
        %v399 = vand.u32 %v398, 4294901760
        %v400 = vsub.f32 %v398, %v399
        %v401 = vand.u32 %v400, 4294901760
        %402 = vmatpush.xpose.msra.mxu0 %v401
        %v403 = vand.u32 %v263, 4294901760
        %v404 = vsub.f32 %v263, %v403
        %v405 = vand.u32 %v404, 4294901760
        %v406 = vsub.f32 %v404, %v405
        %v407 = vand.u32 %v406, 4294901760
        %408 = vmatpush.xpose.msra.mxu0 %v407
        %v409 = vand.u32 %v262, 4294901760
        %v410 = vsub.f32 %v262, %v409
        %v411 = vand.u32 %v410, 4294901760
        %v412 = vsub.f32 %v410, %v411
        %v413 = vand.u32 %v412, 4294901760
        %414 = vmatpush.xpose.msra.mxu0 %v413
        %v415 = vand.u32 %v261, 4294901760
        %416 = vmatmul.f32.gmra.mxu0 %v415
        %v417 = vpop.f32.mrf.mxu0
        %v418 = vadd.f32 %v317, %v417
        %419 = vdwg.mxu0
        %v420 = vand.u32 %v277, 4294901760
        %v421 = vsub.f32 %v277, %v420
        %422 = vmatpush.xpose.msra.mxu0 %v421
        %v423 = vand.u32 %v276, 4294901760
        %v424 = vsub.f32 %v276, %v423
        %425 = vmatpush.xpose.msra.mxu0 %v424
        %v426 = vand.u32 %v275, 4294901760
        %v427 = vsub.f32 %v275, %v426
        %428 = vmatpush.xpose.msra.mxu0 %v427
        %v429 = vand.u32 %v274, 4294901760
        %v430 = vsub.f32 %v274, %v429
        %431 = vmatpush.xpose.msra.mxu0 %v430
        %v432 = vand.u32 %v273, 4294901760
        %v433 = vsub.f32 %v273, %v432
        %434 = vmatpush.xpose.msra.mxu0 %v433
        %v435 = vand.u32 %v272, 4294901760
        %v436 = vsub.f32 %v272, %v435
        %437 = vmatpush.xpose.msra.mxu0 %v436
        %v438 = vand.u32 %v271, 4294901760
        %v439 = vsub.f32 %v271, %v438
        %440 = vmatpush.xpose.msra.mxu0 %v439
        %v441 = vand.u32 %v270, 4294901760
        %v442 = vsub.f32 %v270, %v441
        %443 = vmatpush.xpose.msra.mxu0 %v442
        %v444 = vand.u32 %v269, 4294901760
        %v445 = vsub.f32 %v269, %v444
        %446 = vmatpush.xpose.msra.mxu0 %v445
        %v447 = vand.u32 %v268, 4294901760
        %v448 = vsub.f32 %v268, %v447
        %449 = vmatpush.xpose.msra.mxu0 %v448
        %v450 = vand.u32 %v267, 4294901760
        %v451 = vsub.f32 %v267, %v450
        %452 = vmatpush.xpose.msra.mxu0 %v451
        %v453 = vand.u32 %v266, 4294901760
        %v454 = vsub.f32 %v266, %v453
        %455 = vmatpush.xpose.msra.mxu0 %v454
        %v456 = vand.u32 %v265, 4294901760
        %v457 = vsub.f32 %v265, %v456
        %458 = vmatpush.xpose.msra.mxu0 %v457
        %v459 = vand.u32 %v264, 4294901760
        %v460 = vsub.f32 %v264, %v459
        %461 = vmatpush.xpose.msra.mxu0 %v460
        %v462 = vand.u32 %v263, 4294901760
        %v463 = vsub.f32 %v263, %v462
        %464 = vmatpush.xpose.msra.mxu0 %v463
        %v465 = vand.u32 %v262, 4294901760
        %v466 = vsub.f32 %v262, %v465
        %467 = vmatpush.xpose.msra.mxu0 %v466
        %v468 = vand.u32 %v261, 4294901760
        %v469 = vsub.f32 %v261, %v468
        %470 = vmatmul.f32.gmra.mxu0 %v469
        %v471 = vpop.f32.mrf.mxu0
        %v472 = vadd.f32 %v418, %v471
        %473 = vdwg.mxu0
        %v474 = vand.u32 %v277, 4294901760
        %475 = vmatpush.xpose.msra.mxu0 %v474
        %v476 = vand.u32 %v276, 4294901760
        %477 = vmatpush.xpose.msra.mxu0 %v476
        %v478 = vand.u32 %v275, 4294901760
        %479 = vmatpush.xpose.msra.mxu0 %v478
        %v480 = vand.u32 %v274, 4294901760
        %481 = vmatpush.xpose.msra.mxu0 %v480
        %v482 = vand.u32 %v273, 4294901760
        %483 = vmatpush.xpose.msra.mxu0 %v482
        %v484 = vand.u32 %v272, 4294901760
        %485 = vmatpush.xpose.msra.mxu0 %v484
        %v486 = vand.u32 %v271, 4294901760
        %487 = vmatpush.xpose.msra.mxu0 %v486
        %v488 = vand.u32 %v270, 4294901760
        %489 = vmatpush.xpose.msra.mxu0 %v488
        %v490 = vand.u32 %v269, 4294901760
        %491 = vmatpush.xpose.msra.mxu0 %v490
        %v492 = vand.u32 %v268, 4294901760
        %493 = vmatpush.xpose.msra.mxu0 %v492
        %v494 = vand.u32 %v267, 4294901760
        %495 = vmatpush.xpose.msra.mxu0 %v494
        %v496 = vand.u32 %v266, 4294901760
        %497 = vmatpush.xpose.msra.mxu0 %v496
        %v498 = vand.u32 %v265, 4294901760
        %499 = vmatpush.xpose.msra.mxu0 %v498
        %v500 = vand.u32 %v264, 4294901760
        %501 = vmatpush.xpose.msra.mxu0 %v500
        %v502 = vand.u32 %v263, 4294901760
        %503 = vmatpush.xpose.msra.mxu0 %v502
        %v504 = vand.u32 %v262, 4294901760
        %505 = vmatpush.xpose.msra.mxu0 %v504
        %v506 = vand.u32 %v261, 4294901760
        %v507 = vsub.f32 %v261, %v506
        %v508 = vand.u32 %v507, 4294901760
        %509 = vmatmul.f32.gmra.mxu0 %v508
        %v510 = vpop.f32.mrf.mxu0
        %v511 = vadd.f32 %v472, %v510
        %512 = vdwg.mxu0
        %v513 = vand.u32 %v277, 4294901760
        %v514 = vsub.f32 %v277, %v513
        %v515 = vand.u32 %v514, 4294901760
        %516 = vmatpush.xpose.msra.mxu0 %v515
        %v517 = vand.u32 %v276, 4294901760
        %v518 = vsub.f32 %v276, %v517
        %v519 = vand.u32 %v518, 4294901760
        %520 = vmatpush.xpose.msra.mxu0 %v519
        %v521 = vand.u32 %v275, 4294901760
        %v522 = vsub.f32 %v275, %v521
        %v523 = vand.u32 %v522, 4294901760
        %524 = vmatpush.xpose.msra.mxu0 %v523
        %v525 = vand.u32 %v274, 4294901760
        %v526 = vsub.f32 %v274, %v525
        %v527 = vand.u32 %v526, 4294901760
        %528 = vmatpush.xpose.msra.mxu0 %v527
        %v529 = vand.u32 %v273, 4294901760
        %v530 = vsub.f32 %v273, %v529
        %v531 = vand.u32 %v530, 4294901760
        %532 = vmatpush.xpose.msra.mxu0 %v531
        %v533 = vand.u32 %v272, 4294901760
        %v534 = vsub.f32 %v272, %v533
        %v535 = vand.u32 %v534, 4294901760
        %536 = vmatpush.xpose.msra.mxu0 %v535
        %v537 = vand.u32 %v271, 4294901760
        %v538 = vsub.f32 %v271, %v537
        %v539 = vand.u32 %v538, 4294901760
        %540 = vmatpush.xpose.msra.mxu0 %v539
        %v541 = vand.u32 %v270, 4294901760
        %v542 = vsub.f32 %v270, %v541
        %v543 = vand.u32 %v542, 4294901760
        %544 = vmatpush.xpose.msra.mxu0 %v543
        %v545 = vand.u32 %v269, 4294901760
        %v546 = vsub.f32 %v269, %v545
        %v547 = vand.u32 %v546, 4294901760
        %548 = vmatpush.xpose.msra.mxu0 %v547
        %v549 = vand.u32 %v268, 4294901760
        %v550 = vsub.f32 %v268, %v549
        %v551 = vand.u32 %v550, 4294901760
        %552 = vmatpush.xpose.msra.mxu0 %v551
        %v553 = vand.u32 %v267, 4294901760
        %v554 = vsub.f32 %v267, %v553
        %v555 = vand.u32 %v554, 4294901760
        %556 = vmatpush.xpose.msra.mxu0 %v555
        %v557 = vand.u32 %v266, 4294901760
        %v558 = vsub.f32 %v266, %v557
        %v559 = vand.u32 %v558, 4294901760
        %560 = vmatpush.xpose.msra.mxu0 %v559
        %v561 = vand.u32 %v265, 4294901760
        %v562 = vsub.f32 %v265, %v561
        %v563 = vand.u32 %v562, 4294901760
        %564 = vmatpush.xpose.msra.mxu0 %v563
        %v565 = vand.u32 %v264, 4294901760
        %v566 = vsub.f32 %v264, %v565
        %v567 = vand.u32 %v566, 4294901760
        %568 = vmatpush.xpose.msra.mxu0 %v567
        %v569 = vand.u32 %v263, 4294901760
        %v570 = vsub.f32 %v263, %v569
        %v571 = vand.u32 %v570, 4294901760
        %572 = vmatpush.xpose.msra.mxu0 %v571
        %v573 = vand.u32 %v262, 4294901760
        %v574 = vsub.f32 %v262, %v573
        %v575 = vand.u32 %v574, 4294901760
        %576 = vmatpush.xpose.msra.mxu0 %v575
        %v577 = vand.u32 %v261, 4294901760
        %578 = vmatmul.f32.gmra.mxu0 %v577
        %v579 = vpop.f32.mrf.mxu0
        %v580 = vadd.f32 %v511, %v579
        %581 = vdwg.mxu0
        %v582 = vand.u32 %v277, 4294901760
        %583 = vmatpush.xpose.msra.mxu0 %v582
        %v584 = vand.u32 %v276, 4294901760
        %585 = vmatpush.xpose.msra.mxu0 %v584
        %v586 = vand.u32 %v275, 4294901760
        %587 = vmatpush.xpose.msra.mxu0 %v586
        %v588 = vand.u32 %v274, 4294901760
        %589 = vmatpush.xpose.msra.mxu0 %v588
        %v590 = vand.u32 %v273, 4294901760
        %591 = vmatpush.xpose.msra.mxu0 %v590
        %v592 = vand.u32 %v272, 4294901760
        %593 = vmatpush.xpose.msra.mxu0 %v592
        %v594 = vand.u32 %v271, 4294901760
        %595 = vmatpush.xpose.msra.mxu0 %v594
        %v596 = vand.u32 %v270, 4294901760
        %597 = vmatpush.xpose.msra.mxu0 %v596
        %v598 = vand.u32 %v269, 4294901760
        %599 = vmatpush.xpose.msra.mxu0 %v598
        %v600 = vand.u32 %v268, 4294901760
        %601 = vmatpush.xpose.msra.mxu0 %v600
        %v602 = vand.u32 %v267, 4294901760
        %603 = vmatpush.xpose.msra.mxu0 %v602
        %v604 = vand.u32 %v266, 4294901760
        %605 = vmatpush.xpose.msra.mxu0 %v604
        %v606 = vand.u32 %v265, 4294901760
        %607 = vmatpush.xpose.msra.mxu0 %v606
        %v608 = vand.u32 %v264, 4294901760
        %609 = vmatpush.xpose.msra.mxu0 %v608
        %v610 = vand.u32 %v263, 4294901760
        %611 = vmatpush.xpose.msra.mxu0 %v610
        %v612 = vand.u32 %v262, 4294901760
        %613 = vmatpush.xpose.msra.mxu0 %v612
        %v614 = vand.u32 %v261, 4294901760
        %615 = vmatmul.f32.gmra.mxu0 %v614
        %v616 = vpop.f32.mrf.mxu0
        %v617 = vadd.f32 %v580, %v616
        %618 = vdwg.mxu0
        %v619 = vadd.f32 %v260, %v617
        %620 = vst [vmem:[#allocation2] sm:$0xff] %v619
        // Predicated region
        $region45: #{tpu_custom_call.1} parent=31 // pred_check
          %p621 = pneg %p255
        $region46: #{tpu_custom_call.1} parent=31 // pred_check_branch
          %623 = sbr.rel (%p621) target = $region48
        $region47: #{tpu_custom_call.1} parent=31 // pred_region
          %v624 = vld [vmem:[#allocation2] sm:$0xff]
          %v625 = vld [vmem:[%s254] sm:$0x1]
          %v627 = vperm.slane %v625, 0
          %v629 = vadd.f32 %v624, %v627
          %v630 = vmul.f32 %v629, 0.5
          %v631 = vmul.f32 %v629, 0.70710677
          %v632 = vmul.f32 %v631, %v631
          %v633 = vmin.f32 16.0, %v632
          %v634 = vmul.f32 %v633, 2.1237322e-06
          %v635 = vadd.f32 %v634, 0.00028619796
          %v636 = vmul.f32 %v633, %v635
          %v637 = vadd.f32 %v636, 0.0036580483
          %v638 = vmul.f32 %v633, %v637
          %v639 = vadd.f32 %v638, 0.05243302
          %v640 = vmul.f32 %v633, %v639
          %v641 = vadd.f32 %v640, 0.18741608
          %v642 = vmul.f32 %v633, %v641
          %v643 = vadd.f32 %v642, 1.1283791
          %v644 = vmul.f32 %v631, %v643
          %v645 = vmul.f32 %v633, 3.8918573e-05
          %v646 = vadd.f32 %v645, 0.001143296
          %v647 = vmul.f32 %v633, %v646
          %v648 = vadd.f32 %v647, 0.014752088
          %v649 = vmul.f32 %v633, %v648
          %v650 = vadd.f32 %v649, 0.112945676
          %v651 = vmul.f32 %v633, %v650
          %v652 = vadd.f32 %v651, 0.4994258
          %v653 = vmul.f32 %v633, %v652
          %v654 = vadd.f32 %v653, 1.0
          %v655 = vrcp.pop %v654
          %v656 = vmul.f32 %v654, %v655
          %v657 = vsub.f32 1.0, %v656
          %v658 = vmul.f32 %v655, %v657
          %v659 = vadd.f32 %v655, %v658
          %vm660 = vweird.f32 %v654
          %vm661 = vweird.f32 %v655
          %vm662 = vmor %vm660, %vm661
          %v663 = vsel %vm662, %v655, %v659
          %v664 = vand.u32 2147483647, %v654
          %vm665 = vcmp.eq.f32.partialorder %v664, 8.507059e+37
          %v666 = vand.u32 %v654, 2147483648
          %v667 = vor.u32 1.1754944e-38, %v666
          %v668 = vsel %vm665, %v667, %v663
          %v669 = vmul.f32 %v644, %v668
          %v670 = vmin.f32 %v669, 1.0
          %v671 = vmax.f32 %v670, -1.0
          %v672 = vadd.f32 %v671, 1.0
          %v673 = vmul.f32 %v630, %v672
          %674 = vst [vmem:[%s250] sm:$0xff] %v673
        $region48: #{tpu_custom_call.1} parent=31 // pred_fallthru
          _
        %s675 = sand.u32 %s132, 1
        %s676 = scalar_lea.sflag [#allocation5], %s675
        %s677 = sand.u32 %s132, 1
        %s678 = smul.addr %s677, 8
        %s679 = scalar_lea.vmem [#allocation8], %s678
        // Predicated region
        $region49: #{tpu_custom_call.1} parent=31 // pred_check
          %p680 = pneg %p142
        $region50: #{tpu_custom_call.1} parent=31 // pred_check_branch
          %682 = sbr.rel (%p680) target = $region52
        $region51: #{tpu_custom_call.1} parent=31 // pred_region
          %684 = vsyncadd %s676, 0
          %s685 = sadd.s32 %s27, %s26
          %s686 = smul.addr %s685, 8
          %s687 = scalar_lea.hbm %s3, %s686
          %s689 = sshll.u32 %s679, 4
          %s690 = int_to_ptr.vmem [resolvable:$true] %s689
          %s691 = sshll.u32 %s687, 4
          %s692 = int_to_ptr.hbm [resolvable:$true] %s691
          %694 = dma.vmem_to_hbm [thread:$0]  %s690, 128, %s692, %s676
        $region52: #{tpu_custom_call.1} parent=31 // pred_fallthru
          _
      $region32: #{tpu_custom_call.1} parent=5 // pred_fallthru
        _
      %p695 = scmp.le.s32.totalorder 2, %s16
      // Predicated region
      $region53: #{tpu_custom_call.1} parent=5 // pred_check
        %p696 = pneg %p695
      $region54: #{tpu_custom_call.1} parent=5 // pred_check_branch
        %698 = sbr.rel (%p696) target = $region56
      $region55: #{tpu_custom_call.1} parent=5 // pred_region
        %s699 = ssub.s32 %s16, 2
        // Predicated region
        $region57: #{tpu_custom_call.1} parent=55 // pred_check
          %p700 = pneg %p148
        $region58: #{tpu_custom_call.1} parent=55 // pred_check_branch
          %702 = sbr.rel (%p700) target = $region60
        $region59: #{tpu_custom_call.1} parent=55 // pred_region
          %s703 = sand.u32 %s133, 1
          %s704 = scalar_lea.sflag [#allocation5], %s703
          %s705 = sand.u32 %s133, 1
          %s706 = smul.addr %s705, 8
          %s707 = scalar_lea.vmem [#allocation8], %s706
          %709 = dma.done %s704, 128
        $region60: #{tpu_custom_call.1} parent=55 // pred_fallthru
          _
      $region56: #{tpu_custom_call.1} parent=5 // pred_fallthru
        _
    $region6: #{tpu_custom_call.1} parent=1 // loop_footer
      %s20 = sadd.s32 1, %s16
    $region7: #{tpu_custom_call.1} parent=1 // loop_footer_branch
      %15 = sbr.rel target = $region3
    $region8: #{tpu_custom_call.1} parent=1 // loop_exit
      _
    %710 = vsyncpa [#allocation4], 1
    %s711 = scalar_lea.sflag [#allocation4], 1
    %712 = vsyncpa %s711, 1
    %713 = vsyncpa [#allocation7], 1
    %714 = vsyncpa [#allocation5], 1
    %s715 = scalar_lea.sflag [#allocation5], 1
    %716 = vsyncpa %s715, 1

</llo_original>
